<compile_context>
chip_gen: v5e
topology: v5e:2x2
jax: 0.10.0
libtpu: 0.0.40
codegen_flags: <defaults>
</compile_context>

<pallas_src>
import jax
import jax.numpy as jnp
import numpy as np
from jax.experimental import pallas as pl
from jax.experimental.pallas import tpu as pltpu

EPS = 1e-5
LANE = 128


def _encoder_kernel(x_ref, w1_ref, b1_ref, g1_ref, be1_ref,
                    w2_ref, b2_ref, g2_ref, be2_ref, o_ref):
    """Fused conv1 + bn1 + relu + conv2 + bn2 + relu (training-mode BN).

    x_ref  : (B, T, Cp)       f32 lane-padded input, channels-last
    w*_ref : (3, Cp_in, Cp_o) bf16 conv weights, tap-major, lane-padded
    b*_ref : (1, Cp_o)        f32 conv bias, lane-padded
    g*/be* : (1, Cp_o)        f32 BN gamma / beta, lane-padded (zeros in pad lanes)
    o_ref  : (B, T, Dp2)      f32 lane-padded output
    """
    B, T, Cp = x_ref.shape
    Dp2 = w2_ref.shape[2]
    n = B * T
    inv_n = 1.0 / float(n)

    def conv3(h, w_ref, b_ref):
        # k=3 / pad=1 conv over time. Rows of h are flattened (B, T); the +-1 taps
        # are XLU sublane rolls, and rows that would wrap across a batch boundary
        # are zeroed (== the reference's zero time-padding). Rolls/selects stay in
        # f32; only the MXU operands are cast to bf16.
        rows, c = h.shape
        t_idx = jax.lax.broadcasted_iota(jnp.int32, (B, T, c), 1).reshape(rows, c)
        zero = jnp.zeros_like(h)
        prev_tap = jnp.where(t_idx > 0, pltpu.roll(h, 1, 0), zero)            # h[t-1]
        next_tap = jnp.where(t_idx < T - 1, pltpu.roll(h, rows - 1, 0), zero)  # h[t+1]
        acc = jnp.dot(prev_tap.astype(jnp.bfloat16), w_ref[0],
                      preferred_element_type=jnp.float32)
        acc = acc + jnp.dot(h.astype(jnp.bfloat16), w_ref[1],
                            preferred_element_type=jnp.float32)
        acc = acc + jnp.dot(next_tap.astype(jnp.bfloat16), w_ref[2],
                            preferred_element_type=jnp.float32)
        return acc + b_ref[...]

    def bn_relu(h, g_ref, be_ref):
        # Training-mode BatchNorm1d: per-channel mean / biased var over all rows,
        # two-pass variance (numerically stable), folded affine fused with ReLU.
        mu = jnp.sum(h, axis=0, keepdims=True) * inv_n
        d = h - mu
        var = jnp.sum(d * d, axis=0, keepdims=True) * inv_n
        scale = jax.lax.rsqrt(var + EPS) * g_ref[...]      # (1, C)
        return jnp.maximum(d * scale + be_ref[...], 0.0)

    x2d = x_ref[...].reshape(n, Cp)                                   # lane-dense f32
    h1 = bn_relu(conv3(x2d, w1_ref, b1_ref), g1_ref, be1_ref)         # (n, Dp1) f32
    h2 = bn_relu(conv3(h1, w2_ref, b2_ref), g2_ref, be2_ref)          # (n, Dp2) f32
    o_ref[...] = h2.reshape(B, T, Dp2)


def _round_up(v, m=LANE):
    return ((v + m - 1) // m) * m


def _prep_conv_weight(w_pt, cp_in, cp_out):
    """(C_out, C_in, 3) PyTorch Conv1d weight -> (3, cp_in, cp_out) bf16, zero-padded."""
    c_out, c_in, _ = w_pt.shape
    w = jnp.transpose(w_pt.astype(jnp.float32), (2, 1, 0))        # (tap, c_in, c_out)
    w = jnp.pad(w, ((0, 0), (0, cp_in - c_in), (0, cp_out - c_out)))
    return w.astype(jnp.bfloat16)


def _prep_vec(v, cp):
    return jnp.pad(v.astype(jnp.float32), (0, cp - v.shape[0])).reshape(1, cp)


def _vmem_limit_bytes(B, T, cp_in, dp1, dp2):
    n = B * T
    io_bytes = (n * cp_in + n * dp2) * 4                       # f32 input + padded output
    w_bytes = (3 * cp_in * dp1 + 3 * dp1 * dp2) * 2            # bf16 conv weights
    live = 8 * n * max(cp_in, dp1, dp2) * 4                    # taps / acc / h intermediates
    need = 2 * (io_bytes + w_bytes) + live + (1 << 20)
    try:
        phys = int(getattr(pltpu.get_tpu_info(), "vmem_capacity_bytes",
                           64 * 1024 * 1024))
    except Exception:
        phys = 64 * 1024 * 1024
    return int(min(max(need, 32 * 1024 * 1024), int(phys * 0.75)))


@jax.jit
def encoder_forward(x, w1, b1, g1, be1, w2, b2, g2, be2):
    """x: (B, T, d_input); w1: (d_model, d_input, 3), w2: (d_output, d_model, 3)
    in PyTorch Conv1d layout; returns (B, T, d_output) with training-mode BN."""
    B, T, c_in = x.shape
    d_model = w1.shape[0]
    d_out = w2.shape[0]
    # bn2 is declared with d_model channels in the original module.
    assert g2.shape[0] == d_out and be2.shape[0] == d_out and d_out == d_model, (
        "bn2 has d_model channels; requires d_output == d_model")

    cp_in, dp1, dp2 = _round_up(c_in), _round_up(d_model), _round_up(d_out)

    # One-time layout prep in XLA: lane-pad channels to multiples of 128 so every
    # in-kernel slab, matmul operand and the output store is lane-dense.
    x_p = jnp.pad(x.astype(jnp.float32), ((0, 0), (0, 0), (0, cp_in - c_in)))
    args = (x_p,
            _prep_conv_weight(w1, cp_in, dp1), _prep_vec(b1, dp1),
            _prep_vec(g1, dp1), _prep_vec(be1, dp1),
            _prep_conv_weight(w2, dp1, dp2), _prep_vec(b2, dp2),
            _prep_vec(g2, dp2), _prep_vec(be2, dp2))

    vmem = pl.BlockSpec(memory_space=pltpu.MemorySpace.VMEM)
    out_p = pl.pallas_call(
        _encoder_kernel,
        out_shape=jax.ShapeDtypeStruct((B, T, dp2), jnp.float32),
        in_specs=[vmem] * 9,
        out_specs=vmem,
        compiler_params=pltpu.CompilerParams(
            vmem_limit_bytes=_vmem_limit_bytes(B, T, cp_in, dp1, dp2)),
    )(*args)
    return out_p[..., :d_out]


def _reference(x, w1, b1, g1, be1, w2, b2, g2, be2):
    """Pure-JAX f32 reference replicating the PyTorch forward semantics."""
    def conv(h, w, b):  # h: (B, T, C), w: (C_out, C_in, 3)
        T = h.shape[1]
        hp = jnp.pad(h, ((0, 0), (1, 1), (0, 0)))
        return sum(jnp.einsum('btc,dc->btd', hp[:, k:k + T, :], w[:, :, k])
                   for k in range(3)) + b

    def bn(h, g, be):
        mu = h.mean(axis=(0, 1), keepdims=True)
        var = ((h - mu) ** 2).mean(axis=(0, 1), keepdims=True)
        return (h - mu) / jnp.sqrt(var + EPS) * g + be

    h = jax.nn.relu(bn(conv(x, w1, b1), g1, be1))
    return jax.nn.relu(bn(conv(h, w2, b2), g2, be2))


if __name__ == "__main__":
    # Small shapes implied by the module: (B, seq_len, d_input) input.
    B, T = 2, 16
    d_input, d_model, d_output = 4, 32, 32  # bn2 requires d_output == d_model

    ks = jax.random.split(jax.random.PRNGKey(0), 9)

    # Conv1d weights/biases in PyTorch layout (C_out, C_in, 3).
    s1 = 1.0 / np.sqrt(d_input * 3)
    w1 = jax.random.uniform(ks[0], (d_model, d_input, 3), jnp.float32, -s1, s1)
    b1 = jax.random.uniform(ks[1], (d_model,), jnp.float32, -s1, s1)
    s2 = 1.0 / np.sqrt(d_model * 3)
    w2 = jax.random.uniform(ks[2], (d_output, d_model, 3), jnp.float32, -s2, s2)
    b2 = jax.random.uniform(ks[3], (d_output,), jnp.float32, -s2, s2)

    # BatchNorm affine params (gamma/beta), deterministic non-trivial values.
    g1 = 1.0 + 0.1 * jax.random.normal(ks[4], (d_model,), jnp.float32)
    be1 = 0.1 * jax.random.normal(ks[5], (d_model,), jnp.float32)
    g2 = 1.0 + 0.1 * jax.random.normal(ks[6], (d_output,), jnp.float32)
    be2 = 0.1 * jax.random.normal(ks[7], (d_output,), jnp.float32)

    x = jax.random.normal(ks[8], (B, T, d_input), jnp.float32)

    out = jax.block_until_ready(
        encoder_forward(x, w1, b1, g1, be1, w2, b2, g2, be2))

    ref = _reference(x, w1, b1, g1, be1, w2, b2, g2, be2)
    # bf16 MXU operands (f32 accumulation / BN) -> slightly relaxed tolerance.
    np.testing.assert_allclose(np.asarray(out), np.asarray(ref),
                               rtol=3e-2, atol=3e-2)
    assert out.shape == (B, T, d_output)
    print("KERNEL_OK")
</pallas_src>

<mosaic_0001>
module attributes {stable_mosaic.version = 11 : i64} {
  func.func @_encoder_kernel(%arg0: memref<2x16x128xf32, #tpu.memory_space<vmem>>, %arg1: memref<3x128x128xbf16, #tpu.memory_space<vmem>>, %arg2: memref<1x128xf32, #tpu.memory_space<vmem>>, %arg3: memref<1x128xf32, #tpu.memory_space<vmem>>, %arg4: memref<1x128xf32, #tpu.memory_space<vmem>>, %arg5: memref<3x128x128xbf16, #tpu.memory_space<vmem>>, %arg6: memref<1x128xf32, #tpu.memory_space<vmem>>, %arg7: memref<1x128xf32, #tpu.memory_space<vmem>>, %arg8: memref<1x128xf32, #tpu.memory_space<vmem>>, %arg9: memref<2x16x128xf32, #tpu.memory_space<vmem>>) attributes {dimension_semantics = [], scalar_prefetch = 0 : i64, scratch_operands = 0 : i64, tpu.core_type = #tpu.core_type<tc>} {
    %c0 = arith.constant 0 : index
    %c0_0 = arith.constant 0 : index
    %c0_1 = arith.constant 0 : index
    %0 = vector.load %arg0[%c0, %c0_0, %c0_1] : memref<2x16x128xf32, #tpu.memory_space<vmem>>, vector<2x16x128xf32>
    %1 = vector.shape_cast %0 : vector<2x16x128xf32> to vector<32x128xf32>
    %2 = tpu.iota {dimensions = array<i32: 1>} : vector<2x16x128xi32>
    %3 = vector.shape_cast %2 : vector<2x16x128xi32> to vector<32x128xi32>
    %cst = arith.constant 0.000000e+00 : f32
    %4 = vector.broadcast %cst : f32 to vector<32x128xf32>
    %c0_i32 = arith.constant 0 : i32
    %5 = vector.broadcast %c0_i32 : i32 to vector<32x128xi32>
    %6 = arith.cmpi sgt, %3, %5 : vector<32x128xi32>
    %c1_i32 = arith.constant 1 : i32
    %7 = tpu.dynamic_rotate %1 by %c1_i32 dim 0 : vector<32x128xf32>, i32 -> vector<32x128xf32>
    %8 = arith.select %6, %7, %4 : vector<32x128xi1>, vector<32x128xf32>
    %c15_i32 = arith.constant 15 : i32
    %9 = vector.broadcast %c15_i32 : i32 to vector<32x128xi32>
    %10 = arith.cmpi slt, %3, %9 : vector<32x128xi32>
    %c31_i32 = arith.constant 31 : i32
    %11 = tpu.dynamic_rotate %1 by %c31_i32 dim 0 : vector<32x128xf32>, i32 -> vector<32x128xf32>
    %12 = arith.select %10, %11, %4 : vector<32x128xi1>, vector<32x128xf32>
    %13 = arith.truncf %8 : vector<32x128xf32> to vector<32x128xbf16>
    %c0_2 = arith.constant 0 : index
    %c0_3 = arith.constant 0 : index
    %c0_4 = arith.constant 0 : index
    %14 = vector.load %arg1[%c0_2, %c0_3, %c0_4] : memref<3x128x128xbf16, #tpu.memory_space<vmem>>, vector<1x128x128xbf16>
    %15 = vector.shape_cast %14 : vector<1x128x128xbf16> to vector<128x128xbf16>
    %cst_5 = arith.constant dense<0.000000e+00> : vector<32x128xf32>
    %16 = tpu.matmul %13, %15, %cst_5 {dimension_numbers = #tpu.dot_dimension_numbers<[1], [0], [0], [1], [0, 0, 1, 1], [], []>} : vector<32x128xbf16>, vector<128x128xbf16>, vector<32x128xf32> -> vector<32x128xf32>
    %17 = arith.truncf %1 : vector<32x128xf32> to vector<32x128xbf16>
    %c1 = arith.constant 1 : index
    %c0_6 = arith.constant 0 : index
    %c0_7 = arith.constant 0 : index
    %18 = vector.load %arg1[%c1, %c0_6, %c0_7] : memref<3x128x128xbf16, #tpu.memory_space<vmem>>, vector<1x128x128xbf16>
    %19 = vector.shape_cast %18 : vector<1x128x128xbf16> to vector<128x128xbf16>
    %cst_8 = arith.constant dense<0.000000e+00> : vector<32x128xf32>
    %20 = tpu.matmul %17, %19, %cst_8 {dimension_numbers = #tpu.dot_dimension_numbers<[1], [0], [0], [1], [0, 0, 1, 1], [], []>} : vector<32x128xbf16>, vector<128x128xbf16>, vector<32x128xf32> -> vector<32x128xf32>
    %21 = arith.addf %16, %20 : vector<32x128xf32>
    %22 = arith.truncf %12 : vector<32x128xf32> to vector<32x128xbf16>
    %c2 = arith.constant 2 : index
    %c0_9 = arith.constant 0 : index
    %c0_10 = arith.constant 0 : index
    %23 = vector.load %arg1[%c2, %c0_9, %c0_10] : memref<3x128x128xbf16, #tpu.memory_space<vmem>>, vector<1x128x128xbf16>
    %24 = vector.shape_cast %23 : vector<1x128x128xbf16> to vector<128x128xbf16>
    %cst_11 = arith.constant dense<0.000000e+00> : vector<32x128xf32>
    %25 = tpu.matmul %22, %24, %cst_11 {dimension_numbers = #tpu.dot_dimension_numbers<[1], [0], [0], [1], [0, 0, 1, 1], [], []>} : vector<32x128xbf16>, vector<128x128xbf16>, vector<32x128xf32> -> vector<32x128xf32>
    %26 = arith.addf %21, %25 : vector<32x128xf32>
    %c0_12 = arith.constant 0 : index
    %c0_13 = arith.constant 0 : index
    %27 = vector.load %arg2[%c0_12, %c0_13] : memref<1x128xf32, #tpu.memory_space<vmem>>, vector<1x128xf32>
    %28 = vector.broadcast %27 : vector<1x128xf32> to vector<32x128xf32>
    %29 = arith.addf %26, %28 : vector<32x128xf32>
    %cst_14 = arith.constant dense<0.000000e+00> : vector<128xf32>
    %30 = vector.multi_reduction <add>, %29, %cst_14 [0] : vector<32x128xf32> to vector<128xf32>
    %31 = vector.shape_cast %30 : vector<128xf32> to vector<1x128xf32>
    %cst_15 = arith.constant 3.125000e-02 : f32
    %32 = vector.broadcast %cst_15 : f32 to vector<1x128xf32>
    %33 = arith.mulf %31, %32 : vector<1x128xf32>
    %34 = vector.broadcast %33 : vector<1x128xf32> to vector<32x128xf32>
    %35 = arith.subf %29, %34 : vector<32x128xf32>
    %36 = arith.mulf %35, %35 : vector<32x128xf32>
    %cst_16 = arith.constant dense<0.000000e+00> : vector<128xf32>
    %37 = vector.multi_reduction <add>, %36, %cst_16 [0] : vector<32x128xf32> to vector<128xf32>
    %38 = vector.shape_cast %37 : vector<128xf32> to vector<1x128xf32>
    %cst_17 = arith.constant 3.125000e-02 : f32
    %39 = vector.broadcast %cst_17 : f32 to vector<1x128xf32>
    %40 = arith.mulf %38, %39 : vector<1x128xf32>
    %cst_18 = arith.constant 9.99999974E-6 : f32
    %41 = vector.broadcast %cst_18 : f32 to vector<1x128xf32>
    %42 = arith.addf %40, %41 : vector<1x128xf32>
    %43 = math.rsqrt %42 : vector<1x128xf32>
    %c0_19 = arith.constant 0 : index
    %c0_20 = arith.constant 0 : index
    %44 = vector.load %arg3[%c0_19, %c0_20] : memref<1x128xf32, #tpu.memory_space<vmem>>, vector<1x128xf32>
    %45 = arith.mulf %43, %44 : vector<1x128xf32>
    %46 = vector.broadcast %45 : vector<1x128xf32> to vector<32x128xf32>
    %47 = arith.mulf %35, %46 : vector<32x128xf32>
    %c0_21 = arith.constant 0 : index
    %c0_22 = arith.constant 0 : index
    %48 = vector.load %arg4[%c0_21, %c0_22] : memref<1x128xf32, #tpu.memory_space<vmem>>, vector<1x128xf32>
    %49 = vector.broadcast %48 : vector<1x128xf32> to vector<32x128xf32>
    %50 = arith.addf %47, %49 : vector<32x128xf32>
    %cst_23 = arith.constant 0.000000e+00 : f32
    %51 = vector.broadcast %cst_23 : f32 to vector<32x128xf32>
    %52 = arith.maximumf %50, %51 : vector<32x128xf32>
    %53 = tpu.iota {dimensions = array<i32: 1>} : vector<2x16x128xi32>
    %54 = vector.shape_cast %53 : vector<2x16x128xi32> to vector<32x128xi32>
    %cst_24 = arith.constant 0.000000e+00 : f32
    %55 = vector.broadcast %cst_24 : f32 to vector<32x128xf32>
    %c0_i32_25 = arith.constant 0 : i32
    %56 = vector.broadcast %c0_i32_25 : i32 to vector<32x128xi32>
    %57 = arith.cmpi sgt, %54, %56 : vector<32x128xi32>
    %c1_i32_26 = arith.constant 1 : i32
    %58 = tpu.dynamic_rotate %52 by %c1_i32_26 dim 0 : vector<32x128xf32>, i32 -> vector<32x128xf32>
    %59 = arith.select %57, %58, %55 : vector<32x128xi1>, vector<32x128xf32>
    %c15_i32_27 = arith.constant 15 : i32
    %60 = vector.broadcast %c15_i32_27 : i32 to vector<32x128xi32>
    %61 = arith.cmpi slt, %54, %60 : vector<32x128xi32>
    %c31_i32_28 = arith.constant 31 : i32
    %62 = tpu.dynamic_rotate %52 by %c31_i32_28 dim 0 : vector<32x128xf32>, i32 -> vector<32x128xf32>
    %63 = arith.select %61, %62, %55 : vector<32x128xi1>, vector<32x128xf32>
    %64 = arith.truncf %59 : vector<32x128xf32> to vector<32x128xbf16>
    %c0_29 = arith.constant 0 : index
    %c0_30 = arith.constant 0 : index
    %c0_31 = arith.constant 0 : index
    %65 = vector.load %arg5[%c0_29, %c0_30, %c0_31] : memref<3x128x128xbf16, #tpu.memory_space<vmem>>, vector<1x128x128xbf16>
    %66 = vector.shape_cast %65 : vector<1x128x128xbf16> to vector<128x128xbf16>
    %cst_32 = arith.constant dense<0.000000e+00> : vector<32x128xf32>
    %67 = tpu.matmul %64, %66, %cst_32 {dimension_numbers = #tpu.dot_dimension_numbers<[1], [0], [0], [1], [0, 0, 1, 1], [], []>} : vector<32x128xbf16>, vector<128x128xbf16>, vector<32x128xf32> -> vector<32x128xf32>
    %68 = arith.truncf %52 : vector<32x128xf32> to vector<32x128xbf16>
    %c1_33 = arith.constant 1 : index
    %c0_34 = arith.constant 0 : index
    %c0_35 = arith.constant 0 : index
    %69 = vector.load %arg5[%c1_33, %c0_34, %c0_35] : memref<3x128x128xbf16, #tpu.memory_space<vmem>>, vector<1x128x128xbf16>
    %70 = vector.shape_cast %69 : vector<1x128x128xbf16> to vector<128x128xbf16>
    %cst_36 = arith.constant dense<0.000000e+00> : vector<32x128xf32>
    %71 = tpu.matmul %68, %70, %cst_36 {dimension_numbers = #tpu.dot_dimension_numbers<[1], [0], [0], [1], [0, 0, 1, 1], [], []>} : vector<32x128xbf16>, vector<128x128xbf16>, vector<32x128xf32> -> vector<32x128xf32>
    %72 = arith.addf %67, %71 : vector<32x128xf32>
    %73 = arith.truncf %63 : vector<32x128xf32> to vector<32x128xbf16>
    %c2_37 = arith.constant 2 : index
    %c0_38 = arith.constant 0 : index
    %c0_39 = arith.constant 0 : index
    %74 = vector.load %arg5[%c2_37, %c0_38, %c0_39] : memref<3x128x128xbf16, #tpu.memory_space<vmem>>, vector<1x128x128xbf16>
    %75 = vector.shape_cast %74 : vector<1x128x128xbf16> to vector<128x128xbf16>
    %cst_40 = arith.constant dense<0.000000e+00> : vector<32x128xf32>
    %76 = tpu.matmul %73, %75, %cst_40 {dimension_numbers = #tpu.dot_dimension_numbers<[1], [0], [0], [1], [0, 0, 1, 1], [], []>} : vector<32x128xbf16>, vector<128x128xbf16>, vector<32x128xf32> -> vector<32x128xf32>
    %77 = arith.addf %72, %76 : vector<32x128xf32>
    %c0_41 = arith.constant 0 : index
    %c0_42 = arith.constant 0 : index
    %78 = vector.load %arg6[%c0_41, %c0_42] : memref<1x128xf32, #tpu.memory_space<vmem>>, vector<1x128xf32>
    %79 = vector.broadcast %78 : vector<1x128xf32> to vector<32x128xf32>
    %80 = arith.addf %77, %79 : vector<32x128xf32>
    %cst_43 = arith.constant dense<0.000000e+00> : vector<128xf32>
    %81 = vector.multi_reduction <add>, %80, %cst_43 [0] : vector<32x128xf32> to vector<128xf32>
    %82 = vector.shape_cast %81 : vector<128xf32> to vector<1x128xf32>
    %cst_44 = arith.constant 3.125000e-02 : f32
    %83 = vector.broadcast %cst_44 : f32 to vector<1x128xf32>
    %84 = arith.mulf %82, %83 : vector<1x128xf32>
    %85 = vector.broadcast %84 : vector<1x128xf32> to vector<32x128xf32>
    %86 = arith.subf %80, %85 : vector<32x128xf32>
    %87 = arith.mulf %86, %86 : vector<32x128xf32>
    %cst_45 = arith.constant dense<0.000000e+00> : vector<128xf32>
    %88 = vector.multi_reduction <add>, %87, %cst_45 [0] : vector<32x128xf32> to vector<128xf32>
    %89 = vector.shape_cast %88 : vector<128xf32> to vector<1x128xf32>
    %cst_46 = arith.constant 3.125000e-02 : f32
    %90 = vector.broadcast %cst_46 : f32 to vector<1x128xf32>
    %91 = arith.mulf %89, %90 : vector<1x128xf32>
    %cst_47 = arith.constant 9.99999974E-6 : f32
    %92 = vector.broadcast %cst_47 : f32 to vector<1x128xf32>
    %93 = arith.addf %91, %92 : vector<1x128xf32>
    %94 = math.rsqrt %93 : vector<1x128xf32>
    %c0_48 = arith.constant 0 : index
    %c0_49 = arith.constant 0 : index
    %95 = vector.load %arg7[%c0_48, %c0_49] : memref<1x128xf32, #tpu.memory_space<vmem>>, vector<1x128xf32>
    %96 = arith.mulf %94, %95 : vector<1x128xf32>
    %97 = vector.broadcast %96 : vector<1x128xf32> to vector<32x128xf32>
    %98 = arith.mulf %86, %97 : vector<32x128xf32>
    %c0_50 = arith.constant 0 : index
    %c0_51 = arith.constant 0 : index
    %99 = vector.load %arg8[%c0_50, %c0_51] : memref<1x128xf32, #tpu.memory_space<vmem>>, vector<1x128xf32>
    %100 = vector.broadcast %99 : vector<1x128xf32> to vector<32x128xf32>
    %101 = arith.addf %98, %100 : vector<32x128xf32>
    %cst_52 = arith.constant 0.000000e+00 : f32
    %102 = vector.broadcast %cst_52 : f32 to vector<32x128xf32>
    %103 = arith.maximumf %101, %102 : vector<32x128xf32>
    %104 = vector.shape_cast %103 : vector<32x128xf32> to vector<2x16x128xf32>
    %c0_53 = arith.constant 0 : index
    %c0_54 = arith.constant 0 : index
    %c0_55 = arith.constant 0 : index
    %105 = vector.load %arg9[%c0_53, %c0_54, %c0_55] : memref<2x16x128xf32, #tpu.memory_space<vmem>>, vector<2x16x128xf32>
    tpu.vector_store %arg9[%c0_53, %c0_54, %c0_55], %104 {strides = array<i32>} : memref<2x16x128xf32, #tpu.memory_space<vmem>>, vector<2x16x128xf32>,
    return
  }
}

</mosaic_0001>

<llo_original>
// kernel: encoder_forward.1
$region0: #{encoder_forward.1}
  #allocation0 [shape = 'u32[]', space=smem, size = 0x4, offset = 0x4, fixed_abs, tag = 'smem constant byte address 0x4 - core index']
  #allocation1 [shape = 'u32[72,128]{1,0:T(1,128)}', space=vmem, size = 0x9000, scoped, tag = 'internal scratch']
  %s0 = inlined_call_operand.vmem [shape: f32[2,16,128], index: 0, kind: input, shape index: {}]
  %s1 = inlined_call_operand.vmem [shape: bf16[3,128,128], index: 1, kind: input, shape index: {}]
  %s2 = inlined_call_operand.vmem [shape: f32[1,128], index: 2, kind: input, shape index: {}]
  %s3 = inlined_call_operand.vmem [shape: f32[1,128], index: 3, kind: input, shape index: {}]
  %s4 = inlined_call_operand.vmem [shape: f32[1,128], index: 4, kind: input, shape index: {}]
  %s5 = inlined_call_operand.vmem [shape: bf16[3,128,128], index: 5, kind: input, shape index: {}]
  %s6 = inlined_call_operand.vmem [shape: f32[1,128], index: 6, kind: input, shape index: {}]
  %s7 = inlined_call_operand.vmem [shape: f32[1,128], index: 7, kind: input, shape index: {}]
  %s8 = inlined_call_operand.vmem [shape: f32[1,128], index: 8, kind: input, shape index: {}]
  %s9 = inlined_call_operand.hbm [shape: f32[2,16,128], index: 9, kind: output, shape index: {}]
  %s10 = sld [smem:[#allocation0]]
  $region46: #{encoder_forward.1} parent=0
    _
  %s12 = ssub.s32 1, %s10
  %s13 = scalar_select 0, %s12, %s10
  $region1: #{encoder_forward.1} parent=0
    #allocation2 [shape = 'u8[16384]{0}', space=vmem, size = 0x4000, scoped, tag = 'output window, operand 0, single buffered']
    #allocation3 [shape = 's32[1]{0}', space=sflag, size = 0x4, scoped, tag = 'scoped memory for encoder_forward.1']
    %14 = vsyncpa [#allocation3], 0
    // Predicated region
    $region2: #{encoder_forward.1} parent=1 // pred_check
      _
    $region3: #{encoder_forward.1} parent=1 // pred_check_branch
      %16 = sbr.rel (0) target = $region5
    $region4: #{encoder_forward.1} parent=1 // pred_region
      _
    $region5: #{encoder_forward.1} parent=1 // pred_fallthru
      _
    // Predicated region
    $region6: #{encoder_forward.1} parent=1 // pred_check
      _
    $region7: #{encoder_forward.1} parent=1 // pred_check_branch
      %18 = sbr.rel (0) target = $region9
    $region8: #{encoder_forward.1} parent=1 // pred_region
      _
    $region9: #{encoder_forward.1} parent=1 // pred_fallthru
      _
    // Predicated region
    $region10: #{encoder_forward.1} parent=1 // pred_check
      _
    $region11: #{encoder_forward.1} parent=1 // pred_check_branch
      %20 = sbr.rel (0) target = $region13
    $region12: #{encoder_forward.1} parent=1 // pred_region
      _
    $region13: #{encoder_forward.1} parent=1 // pred_fallthru
      _
    // Predicated region
    $region14: #{encoder_forward.1} parent=1 // pred_check
      _
    $region15: #{encoder_forward.1} parent=1 // pred_check_branch
      %22 = sbr.rel (0) target = $region17
    $region16: #{encoder_forward.1} parent=1 // pred_region
      _
    $region17: #{encoder_forward.1} parent=1 // pred_fallthru
      _
    // Predicated region
    $region18: #{encoder_forward.1} parent=1 // pred_check
      _
    $region19: #{encoder_forward.1} parent=1 // pred_check_branch
      %24 = sbr.rel (0) target = $region21
    $region20: #{encoder_forward.1} parent=1 // pred_region
      _
    $region21: #{encoder_forward.1} parent=1 // pred_fallthru
      _
    // Predicated region
    $region22: #{encoder_forward.1} parent=1 // pred_check
      _
    $region23: #{encoder_forward.1} parent=1 // pred_check_branch
      %26 = sbr.rel (0) target = $region25
    $region24: #{encoder_forward.1} parent=1 // pred_region
      _
    $region25: #{encoder_forward.1} parent=1 // pred_fallthru
      _
    // Predicated region
    $region26: #{encoder_forward.1} parent=1 // pred_check
      _
    $region27: #{encoder_forward.1} parent=1 // pred_check_branch
      %28 = sbr.rel (0) target = $region29
    $region28: #{encoder_forward.1} parent=1 // pred_region
      _
    $region29: #{encoder_forward.1} parent=1 // pred_fallthru
      _
    // Predicated region
    $region30: #{encoder_forward.1} parent=1 // pred_check
      _
    $region31: #{encoder_forward.1} parent=1 // pred_check_branch
      %30 = sbr.rel (0) target = $region33
    $region32: #{encoder_forward.1} parent=1 // pred_region
      _
    $region33: #{encoder_forward.1} parent=1 // pred_fallthru
      _
    // Predicated region
    $region34: #{encoder_forward.1} parent=1 // pred_check
      _
    $region35: #{encoder_forward.1} parent=1 // pred_check_branch
      %32 = sbr.rel (0) target = $region37
    $region36: #{encoder_forward.1} parent=1 // pred_region
      _
    $region37: #{encoder_forward.1} parent=1 // pred_fallthru
      _
    %v33 = vld [vmem:[%s0] sm:$0xff]
    %v34 = vld [vmem:[%s0 + $0x8] sm:$0xff]
    %v35 = vld [vmem:[%s0 + $0x10] sm:$0xff]
    %v36 = vld [vmem:[%s0 + $0x18] sm:$0xff]
    %v37 = vlaneseq
    %v38 = vshrl.u32 %v37, 7
    %v39 = vadd.s32 %v38, 8
    %vm40 = vcmp.gt.s32.totalorder %v38, 0
    %vm41 = vcmp.gt.s32.totalorder %v39, 0
    %v42 = vrot.slane %v33, 7
    %v43 = vrot.slane %v34, 7
    %v44 = vrot.slane %v35, 7
    %v45 = vrot.slane %v36, 7
    %vm46 = vcmp.lt.s32.totalorder %v38, 1
    %v47 = vsel %vm46, %v44, %v45
    %v48 = vsel %vm46, %v43, %v44
    %v49 = vsel %vm46, %v42, %v43
    %v50 = vsel %vm46, %v45, %v42
    %v51 = vsel %vm40, %v50, 0.0
    %v52 = vsel %vm41, %v49, 0.0
    %v53 = vsel %vm40, %v48, 0.0
    %v54 = vsel %vm41, %v47, 0.0
    %vm55 = vcmp.lt.s32.totalorder %v38, 15
    %vm56 = vcmp.lt.s32.totalorder %v39, 15
    %v57 = vrot.slane %v33, 1
    %v58 = vrot.slane %v34, 1
    %v59 = vrot.slane %v35, 1
    %v60 = vrot.slane %v36, 1
    %vm61 = vcmp.lt.s32.totalorder %v38, 7
    %v62 = vsel %vm61, %v59, %v60
    %v63 = vsel %vm61, %v58, %v59
    %v64 = vsel %vm61, %v57, %v58
    %v65 = vsel %vm61, %v60, %v57
    %v66 = vsel %vm55, %v64, 0.0
    %v67 = vsel %vm56, %v63, 0.0
    %v68 = vsel %vm55, %v62, 0.0
    %v69 = vsel %vm56, %v65, 0.0
    %v70 = vpack.c.bf16 %v52, %v51
    %v71 = vpack.c.bf16 %v54, %v53
    %v72 = vld [vmem:[%s1] sm:$0xf]
    %v73 = vld [vmem:[%s1 + $0x4] sm:$0xf]
    %v74 = vld [vmem:[%s1 + $0x8] sm:$0xf]
    %v75 = vld [vmem:[%s1 + $0xc] sm:$0xf]
    %v76 = vld [vmem:[%s1 + $0x10] sm:$0xf]
    %v77 = vld [vmem:[%s1 + $0x14] sm:$0xf]
    %v78 = vld [vmem:[%s1 + $0x18] sm:$0xf]
    %v79 = vld [vmem:[%s1 + $0x1c] sm:$0xf]
    %v80 = vld [vmem:[%s1 + $0x20] sm:$0xf]
    %v81 = vld [vmem:[%s1 + $0x24] sm:$0xf]
    %v82 = vld [vmem:[%s1 + $0x28] sm:$0xf]
    %v83 = vld [vmem:[%s1 + $0x2c] sm:$0xf]
    %v84 = vld [vmem:[%s1 + $0x30] sm:$0xf]
    %v85 = vld [vmem:[%s1 + $0x34] sm:$0xf]
    %v86 = vld [vmem:[%s1 + $0x38] sm:$0xf]
    %v87 = vld [vmem:[%s1 + $0x3c] sm:$0xf]
    %v88 = vpack.c.bf16 %v34, %v33
    %v89 = vpack.c.bf16 %v36, %v35
    %s90 = scalar_lea.vmem %s1, 64
    %v91 = vld [vmem:[%s90] sm:$0xf]
    %v92 = vld [vmem:[%s90 + $0x4] sm:$0xf]
    %v93 = vld [vmem:[%s90 + $0x8] sm:$0xf]
    %v94 = vld [vmem:[%s90 + $0xc] sm:$0xf]
    %v95 = vld [vmem:[%s90 + $0x10] sm:$0xf]
    %v96 = vld [vmem:[%s90 + $0x14] sm:$0xf]
    %v97 = vld [vmem:[%s90 + $0x18] sm:$0xf]
    %v98 = vld [vmem:[%s90 + $0x1c] sm:$0xf]
    %v99 = vld [vmem:[%s90 + $0x20] sm:$0xf]
    %v100 = vld [vmem:[%s90 + $0x24] sm:$0xf]
    %v101 = vld [vmem:[%s90 + $0x28] sm:$0xf]
    %v102 = vld [vmem:[%s90 + $0x2c] sm:$0xf]
    %v103 = vld [vmem:[%s90 + $0x30] sm:$0xf]
    %v104 = vld [vmem:[%s90 + $0x34] sm:$0xf]
    %v105 = vld [vmem:[%s90 + $0x38] sm:$0xf]
    %v106 = vld [vmem:[%s90 + $0x3c] sm:$0xf]
    %v123 = vunpack.c.l.b16 %v91
    %v124 = vunpack.c.l.b16 %v92
    %v125 = vunpack.c.l.b16 %v93
    %v126 = vunpack.c.l.b16 %v94
    %v127 = vunpack.c.l.b16 %v95
    %v128 = vunpack.c.l.b16 %v96
    %v129 = vunpack.c.l.b16 %v97
    %v130 = vunpack.c.l.b16 %v98
    %v131 = vunpack.c.l.b16 %v99
    %v132 = vunpack.c.l.b16 %v100
    %v133 = vunpack.c.l.b16 %v101
    %v134 = vunpack.c.l.b16 %v102
    %v135 = vunpack.c.l.b16 %v103
    %v136 = vunpack.c.l.b16 %v104
    %v137 = vunpack.c.l.b16 %v105
    %v138 = vunpack.c.l.b16 %v106
    %v139 = vpack.c.b16 %v124, %v123
    %v140 = vpack.c.b16 %v126, %v125
    %v141 = vpack.c.b16 %v128, %v127
    %v142 = vpack.c.b16 %v130, %v129
    %v143 = vpack.c.b16 %v132, %v131
    %v144 = vpack.c.b16 %v134, %v133
    %v145 = vpack.c.b16 %v136, %v135
    %v146 = vpack.c.b16 %v138, %v137
    %155 = vmatpush.bf16.msra.mxu0 %v146
    %156 = vmatpush.bf16.msra.mxu0 %v145
    %157 = vmatpush.bf16.msra.mxu0 %v144
    %158 = vmatpush.bf16.msra.mxu0 %v143
    %159 = vmatpush.bf16.msra.mxu0 %v142
    %160 = vmatpush.bf16.msra.mxu0 %v141
    %161 = vmatpush.bf16.msra.mxu0 %v140
    %162 = vmatpush.bf16.msra.mxu0 %v139
    %163 = vmatmul.bf16.gmra.mxu0 %v88
    %v164 = vpop.f32.mrf.mxu0
    %v165 = vadd.f32 0.0, %v164
    %v166 = vpop.f32.mrf.mxu0
    %v167 = vadd.f32 0.0, %v166
    %168 = vmatmul.bf16.gmra.mxu0 %v89
    %v169 = vpop.f32.mrf.mxu0
    %v170 = vadd.f32 0.0, %v169
    %v171 = vpop.f32.mrf.mxu0
    %v172 = vadd.f32 0.0, %v171
    %173 = vdwg.mxu0
    %v190 = vunpack.c.l.b16 %v72
    %v191 = vunpack.c.l.b16 %v73
    %v192 = vunpack.c.l.b16 %v74
    %v193 = vunpack.c.l.b16 %v75
    %v194 = vunpack.c.l.b16 %v76
    %v195 = vunpack.c.l.b16 %v77
    %v196 = vunpack.c.l.b16 %v78
    %v197 = vunpack.c.l.b16 %v79
    %v198 = vunpack.c.l.b16 %v80
    %v199 = vunpack.c.l.b16 %v81
    %v200 = vunpack.c.l.b16 %v82
    %v201 = vunpack.c.l.b16 %v83
    %v202 = vunpack.c.l.b16 %v84
    %v203 = vunpack.c.l.b16 %v85
    %v204 = vunpack.c.l.b16 %v86
    %v205 = vunpack.c.l.b16 %v87
    %v206 = vpack.c.b16 %v191, %v190
    %v207 = vpack.c.b16 %v193, %v192
    %v208 = vpack.c.b16 %v195, %v194
    %v209 = vpack.c.b16 %v197, %v196
    %v210 = vpack.c.b16 %v199, %v198
    %v211 = vpack.c.b16 %v201, %v200
    %v212 = vpack.c.b16 %v203, %v202
    %v213 = vpack.c.b16 %v205, %v204
    %222 = vmatpush.bf16.msra.mxu0 %v213
    %223 = vmatpush.bf16.msra.mxu0 %v212
    %224 = vmatpush.bf16.msra.mxu0 %v211
    %225 = vmatpush.bf16.msra.mxu0 %v210
    %226 = vmatpush.bf16.msra.mxu0 %v209
    %227 = vmatpush.bf16.msra.mxu0 %v208
    %228 = vmatpush.bf16.msra.mxu0 %v207
    %229 = vmatpush.bf16.msra.mxu0 %v206
    %230 = vmatmul.bf16.gmra.mxu0 %v70
    %v231 = vpop.f32.mrf.mxu0
    %v232 = vadd.f32 %v165, %v231
    %v233 = vpop.f32.mrf.mxu0
    %v234 = vadd.f32 %v167, %v233
    %235 = vmatmul.bf16.gmra.mxu0 %v71
    %v236 = vpop.f32.mrf.mxu0
    %v237 = vadd.f32 %v170, %v236
    %v238 = vpop.f32.mrf.mxu0
    %v239 = vadd.f32 %v172, %v238
    %240 = vdwg.mxu0
    %v241 = vpack.c.bf16 %v67, %v66
    %v242 = vpack.c.bf16 %v69, %v68
    %s243 = scalar_lea.vmem %s1, 128
    %v244 = vld [vmem:[%s243] sm:$0xf]
    %v245 = vld [vmem:[%s243 + $0x4] sm:$0xf]
    %v246 = vld [vmem:[%s243 + $0x8] sm:$0xf]
    %v247 = vld [vmem:[%s243 + $0xc] sm:$0xf]
    %v248 = vld [vmem:[%s243 + $0x10] sm:$0xf]
    %v249 = vld [vmem:[%s243 + $0x14] sm:$0xf]
    %v250 = vld [vmem:[%s243 + $0x18] sm:$0xf]
    %v251 = vld [vmem:[%s243 + $0x1c] sm:$0xf]
    %v252 = vld [vmem:[%s243 + $0x20] sm:$0xf]
    %v253 = vld [vmem:[%s243 + $0x24] sm:$0xf]
    %v254 = vld [vmem:[%s243 + $0x28] sm:$0xf]
    %v255 = vld [vmem:[%s243 + $0x2c] sm:$0xf]
    %v256 = vld [vmem:[%s243 + $0x30] sm:$0xf]
    %v257 = vld [vmem:[%s243 + $0x34] sm:$0xf]
    %v258 = vld [vmem:[%s243 + $0x38] sm:$0xf]
    %v259 = vld [vmem:[%s243 + $0x3c] sm:$0xf]
    %v276 = vunpack.c.l.b16 %v244
    %v277 = vunpack.c.l.b16 %v245
    %v278 = vunpack.c.l.b16 %v246
    %v279 = vunpack.c.l.b16 %v247
    %v280 = vunpack.c.l.b16 %v248
    %v281 = vunpack.c.l.b16 %v249
    %v282 = vunpack.c.l.b16 %v250
    %v283 = vunpack.c.l.b16 %v251
    %v284 = vunpack.c.l.b16 %v252
    %v285 = vunpack.c.l.b16 %v253
    %v286 = vunpack.c.l.b16 %v254
    %v287 = vunpack.c.l.b16 %v255
    %v288 = vunpack.c.l.b16 %v256
    %v289 = vunpack.c.l.b16 %v257
    %v290 = vunpack.c.l.b16 %v258
    %v291 = vunpack.c.l.b16 %v259
    %v292 = vpack.c.b16 %v277, %v276
    %v293 = vpack.c.b16 %v279, %v278
    %v294 = vpack.c.b16 %v281, %v280
    %v295 = vpack.c.b16 %v283, %v282
    %v296 = vpack.c.b16 %v285, %v284
    %v297 = vpack.c.b16 %v287, %v286
    %v298 = vpack.c.b16 %v289, %v288
    %v299 = vpack.c.b16 %v291, %v290
    %308 = vmatpush.bf16.msra.mxu0 %v299
    %309 = vmatpush.bf16.msra.mxu0 %v298
    %310 = vmatpush.bf16.msra.mxu0 %v297
    %311 = vmatpush.bf16.msra.mxu0 %v296
    %312 = vmatpush.bf16.msra.mxu0 %v295
    %313 = vmatpush.bf16.msra.mxu0 %v294
    %314 = vmatpush.bf16.msra.mxu0 %v293
    %315 = vmatpush.bf16.msra.mxu0 %v292
    %316 = vmatmul.bf16.gmra.mxu0 %v241
    %v317 = vpop.f32.mrf.mxu0
    %v318 = vadd.f32 0.0, %v317
    %v319 = vpop.f32.mrf.mxu0
    %v320 = vadd.f32 0.0, %v319
    %321 = vmatmul.bf16.gmra.mxu0 %v242
    %v322 = vpop.f32.mrf.mxu0
    %v323 = vadd.f32 0.0, %v322
    %v324 = vpop.f32.mrf.mxu0
    %v325 = vadd.f32 0.0, %v324
    %326 = vdwg.mxu0
    %v327 = vadd.f32 %v232, %v318
    %v328 = vadd.f32 %v234, %v320
    %v329 = vadd.f32 %v237, %v323
    %v330 = vadd.f32 %v239, %v325
    %v331 = vld [vmem:[%s2] sm:$0x1]
    %v333 = vperm.slane %v331, 0
    %v335 = vadd.f32 %v327, %v333
    %v336 = vadd.f32 %v328, %v333
    %v337 = vadd.f32 %v329, %v333
    %v338 = vadd.f32 %v330, %v333
    %v339 = vadd.f32 %v335, %v336
    %v340 = vadd.f32 %v339, %v337
    %v341 = vadd.f32 %v340, %v338
    %v342 = vrot.slane %v341, 4
    %v343 = vadd.f32 %v341, %v342
    %v344 = vrot.slane %v343, 2
    %v345 = vadd.f32 %v343, %v344
    %v346 = vrot.slane %v345, 1
    %v347 = vadd.f32 %v345, %v346
    %v348 = vmul.f32 %v347, 0.03125
    %v349 = vsub.f32 %v335, %v348
    %v350 = vsub.f32 %v336, %v348
    %v351 = vsub.f32 %v337, %v348
    %v352 = vsub.f32 %v338, %v348
    %v353 = vmul.f32 %v349, %v349
    %v354 = vmul.f32 %v350, %v350
    %v355 = vmul.f32 %v351, %v351
    %v356 = vmul.f32 %v352, %v352
    %v357 = vadd.f32 %v353, %v354
    %v358 = vadd.f32 %v357, %v355
    %v359 = vadd.f32 %v358, %v356
    %v360 = vrot.slane %v359, 4
    %v361 = vadd.f32 %v359, %v360
    %v362 = vrot.slane %v361, 2
    %v363 = vadd.f32 %v361, %v362
    %v364 = vrot.slane %v363, 1
    %v365 = vadd.f32 %v363, %v364
    %v366 = vmul.f32 %v365, 0.03125
    %v367 = vadd.f32 %v366, 1e-05
    %v368 = vrsqrt.pop %v367
    %v369 = vmul.f32 %v368, %v367
    %v370 = vmul.f32 %v369, %v368
    %v371 = vmul.f32 0.5, %v370
    %v372 = vsub.f32 1.5, %v371
    %v373 = vmul.f32 %v368, %v372
    %vm374 = vweird.f32 %v367
    %vm375 = vweird.f32 %v368
    %vm376 = vmor %vm374, %vm375
    %v377 = vsel %vm376, %v368, %v373
    %v378 = vld [vmem:[%s3] sm:$0x1]
    %v379 = vmul.f32 %v377, %v378
    %v380 = vperm.slane %v379, 0
    %v381 = vmul.f32 %v349, %v380
    %v382 = vmul.f32 %v350, %v380
    %v383 = vmul.f32 %v351, %v380
    %v384 = vmul.f32 %v352, %v380
    %v385 = vld [vmem:[%s4] sm:$0x1]
    %v387 = vperm.slane %v385, 0
    %v389 = vadd.f32 %v381, %v387
    %v390 = vadd.f32 %v382, %v387
    %v391 = vadd.f32 %v383, %v387
    %v392 = vadd.f32 %v384, %v387
    %v393 = vmax.f32 %v389, 0.0
    %v394 = vmax.f32 %v390, 0.0
    %v395 = vmax.f32 %v391, 0.0
    %v396 = vmax.f32 %v392, 0.0
    %v397 = vrot.slane %v393, 7
    %v398 = vrot.slane %v394, 7
    %v399 = vrot.slane %v395, 7
    %v400 = vrot.slane %v396, 7
    %v401 = vsel %vm46, %v399, %v400
    %v402 = vsel %vm46, %v398, %v399
    %v403 = vsel %vm46, %v397, %v398
    %v404 = vsel %vm46, %v400, %v397
    %v405 = vsel %vm40, %v404, 0.0
    %v406 = vsel %vm41, %v403, 0.0
    %v407 = vsel %vm40, %v402, 0.0
    %v408 = vsel %vm41, %v401, 0.0
    %v409 = vrot.slane %v393, 1
    %v410 = vrot.slane %v394, 1
    %v411 = vrot.slane %v395, 1
    %v412 = vrot.slane %v396, 1
    %v413 = vsel %vm61, %v411, %v412
    %v414 = vsel %vm61, %v410, %v411
    %v415 = vsel %vm61, %v409, %v410
    %v416 = vsel %vm61, %v412, %v409
    %v417 = vsel %vm55, %v415, 0.0
    %v418 = vsel %vm56, %v414, 0.0
    %v419 = vsel %vm55, %v413, 0.0
    %v420 = vsel %vm56, %v416, 0.0
    %v421 = vpack.c.bf16 %v406, %v405
    %v422 = vpack.c.bf16 %v408, %v407
    %v423 = vld [vmem:[%s5] sm:$0xf]
    %v424 = vld [vmem:[%s5 + $0x4] sm:$0xf]
    %v425 = vld [vmem:[%s5 + $0x8] sm:$0xf]
    %v426 = vld [vmem:[%s5 + $0xc] sm:$0xf]
    %v427 = vld [vmem:[%s5 + $0x10] sm:$0xf]
    %v428 = vld [vmem:[%s5 + $0x14] sm:$0xf]
    %v429 = vld [vmem:[%s5 + $0x18] sm:$0xf]
    %v430 = vld [vmem:[%s5 + $0x1c] sm:$0xf]
    %v431 = vld [vmem:[%s5 + $0x20] sm:$0xf]
    %v432 = vld [vmem:[%s5 + $0x24] sm:$0xf]
    %v433 = vld [vmem:[%s5 + $0x28] sm:$0xf]
    %v434 = vld [vmem:[%s5 + $0x2c] sm:$0xf]
    %v435 = vld [vmem:[%s5 + $0x30] sm:$0xf]
    %v436 = vld [vmem:[%s5 + $0x34] sm:$0xf]
    %v437 = vld [vmem:[%s5 + $0x38] sm:$0xf]
    %v438 = vld [vmem:[%s5 + $0x3c] sm:$0xf]
    %v439 = vpack.c.bf16 %v394, %v393
    %v440 = vpack.c.bf16 %v396, %v395
    %s441 = scalar_lea.vmem %s5, 64
    %v442 = vld [vmem:[%s441] sm:$0xf]
    %v443 = vld [vmem:[%s441 + $0x4] sm:$0xf]
    %v444 = vld [vmem:[%s441 + $0x8] sm:$0xf]
    %v445 = vld [vmem:[%s441 + $0xc] sm:$0xf]
    %v446 = vld [vmem:[%s441 + $0x10] sm:$0xf]
    %v447 = vld [vmem:[%s441 + $0x14] sm:$0xf]
    %v448 = vld [vmem:[%s441 + $0x18] sm:$0xf]
    %v449 = vld [vmem:[%s441 + $0x1c] sm:$0xf]
    %v450 = vld [vmem:[%s441 + $0x20] sm:$0xf]
    %v451 = vld [vmem:[%s441 + $0x24] sm:$0xf]
    %v452 = vld [vmem:[%s441 + $0x28] sm:$0xf]
    %v453 = vld [vmem:[%s441 + $0x2c] sm:$0xf]
    %v454 = vld [vmem:[%s441 + $0x30] sm:$0xf]
    %v455 = vld [vmem:[%s441 + $0x34] sm:$0xf]
    %v456 = vld [vmem:[%s441 + $0x38] sm:$0xf]
    %v457 = vld [vmem:[%s441 + $0x3c] sm:$0xf]
    %v474 = vunpack.c.l.b16 %v442
    %v475 = vunpack.c.l.b16 %v443
    %v476 = vunpack.c.l.b16 %v444
    %v477 = vunpack.c.l.b16 %v445
    %v478 = vunpack.c.l.b16 %v446
    %v479 = vunpack.c.l.b16 %v447
    %v480 = vunpack.c.l.b16 %v448
    %v481 = vunpack.c.l.b16 %v449
    %v482 = vunpack.c.l.b16 %v450
    %v483 = vunpack.c.l.b16 %v451
    %v484 = vunpack.c.l.b16 %v452
    %v485 = vunpack.c.l.b16 %v453
    %v486 = vunpack.c.l.b16 %v454
    %v487 = vunpack.c.l.b16 %v455
    %v488 = vunpack.c.l.b16 %v456
    %v489 = vunpack.c.l.b16 %v457
    %v490 = vpack.c.b16 %v475, %v474
    %v491 = vpack.c.b16 %v477, %v476
    %v492 = vpack.c.b16 %v479, %v478
    %v493 = vpack.c.b16 %v481, %v480
    %v494 = vpack.c.b16 %v483, %v482
    %v495 = vpack.c.b16 %v485, %v484
    %v496 = vpack.c.b16 %v487, %v486
    %v497 = vpack.c.b16 %v489, %v488
    %506 = vmatpush.bf16.msra.mxu0 %v497
    %507 = vmatpush.bf16.msra.mxu0 %v496
    %508 = vmatpush.bf16.msra.mxu0 %v495
    %509 = vmatpush.bf16.msra.mxu0 %v494
    %510 = vmatpush.bf16.msra.mxu0 %v493
    %511 = vmatpush.bf16.msra.mxu0 %v492
    %512 = vmatpush.bf16.msra.mxu0 %v491
    %513 = vmatpush.bf16.msra.mxu0 %v490
    %514 = vmatmul.bf16.gmra.mxu0 %v439
    %v515 = vpop.f32.mrf.mxu0
    %v516 = vadd.f32 0.0, %v515
    %v517 = vpop.f32.mrf.mxu0
    %v518 = vadd.f32 0.0, %v517
    %519 = vmatmul.bf16.gmra.mxu0 %v440
    %v520 = vpop.f32.mrf.mxu0
    %v521 = vadd.f32 0.0, %v520
    %v522 = vpop.f32.mrf.mxu0
    %v523 = vadd.f32 0.0, %v522
    %524 = vdwg.mxu0
    %v541 = vunpack.c.l.b16 %v423
    %v542 = vunpack.c.l.b16 %v424
    %v543 = vunpack.c.l.b16 %v425
    %v544 = vunpack.c.l.b16 %v426
    %v545 = vunpack.c.l.b16 %v427
    %v546 = vunpack.c.l.b16 %v428
    %v547 = vunpack.c.l.b16 %v429
    %v548 = vunpack.c.l.b16 %v430
    %v549 = vunpack.c.l.b16 %v431
    %v550 = vunpack.c.l.b16 %v432
    %v551 = vunpack.c.l.b16 %v433
    %v552 = vunpack.c.l.b16 %v434
    %v553 = vunpack.c.l.b16 %v435
    %v554 = vunpack.c.l.b16 %v436
    %v555 = vunpack.c.l.b16 %v437
    %v556 = vunpack.c.l.b16 %v438
    %v557 = vpack.c.b16 %v542, %v541
    %v558 = vpack.c.b16 %v544, %v543
    %v559 = vpack.c.b16 %v546, %v545
    %v560 = vpack.c.b16 %v548, %v547
    %v561 = vpack.c.b16 %v550, %v549
    %v562 = vpack.c.b16 %v552, %v551
    %v563 = vpack.c.b16 %v554, %v553
    %v564 = vpack.c.b16 %v556, %v555
    %573 = vmatpush.bf16.msra.mxu0 %v564
    %574 = vmatpush.bf16.msra.mxu0 %v563
    %575 = vmatpush.bf16.msra.mxu0 %v562
    %576 = vmatpush.bf16.msra.mxu0 %v561
    %577 = vmatpush.bf16.msra.mxu0 %v560
    %578 = vmatpush.bf16.msra.mxu0 %v559
    %579 = vmatpush.bf16.msra.mxu0 %v558
    %580 = vmatpush.bf16.msra.mxu0 %v557
    %581 = vmatmul.bf16.gmra.mxu0 %v421
    %v582 = vpop.f32.mrf.mxu0
    %v583 = vadd.f32 %v516, %v582
    %v584 = vpop.f32.mrf.mxu0
    %v585 = vadd.f32 %v518, %v584
    %586 = vmatmul.bf16.gmra.mxu0 %v422
    %v587 = vpop.f32.mrf.mxu0
    %v588 = vadd.f32 %v521, %v587
    %v589 = vpop.f32.mrf.mxu0
    %v590 = vadd.f32 %v523, %v589
    %591 = vdwg.mxu0
    %v592 = vpack.c.bf16 %v418, %v417
    %v593 = vpack.c.bf16 %v420, %v419
    %s594 = scalar_lea.vmem %s5, 128
    %v595 = vld [vmem:[%s594] sm:$0xf]
    %v596 = vld [vmem:[%s594 + $0x4] sm:$0xf]
    %v597 = vld [vmem:[%s594 + $0x8] sm:$0xf]
    %v598 = vld [vmem:[%s594 + $0xc] sm:$0xf]
    %v599 = vld [vmem:[%s594 + $0x10] sm:$0xf]
    %v600 = vld [vmem:[%s594 + $0x14] sm:$0xf]
    %v601 = vld [vmem:[%s594 + $0x18] sm:$0xf]
    %v602 = vld [vmem:[%s594 + $0x1c] sm:$0xf]
    %v603 = vld [vmem:[%s594 + $0x20] sm:$0xf]
    %v604 = vld [vmem:[%s594 + $0x24] sm:$0xf]
    %v605 = vld [vmem:[%s594 + $0x28] sm:$0xf]
    %v606 = vld [vmem:[%s594 + $0x2c] sm:$0xf]
    %v607 = vld [vmem:[%s594 + $0x30] sm:$0xf]
    %v608 = vld [vmem:[%s594 + $0x34] sm:$0xf]
    %v609 = vld [vmem:[%s594 + $0x38] sm:$0xf]
    %v610 = vld [vmem:[%s594 + $0x3c] sm:$0xf]
    %v627 = vunpack.c.l.b16 %v595
    %v628 = vunpack.c.l.b16 %v596
    %v629 = vunpack.c.l.b16 %v597
    %v630 = vunpack.c.l.b16 %v598
    %v631 = vunpack.c.l.b16 %v599
    %v632 = vunpack.c.l.b16 %v600
    %v633 = vunpack.c.l.b16 %v601
    %v634 = vunpack.c.l.b16 %v602
    %v635 = vunpack.c.l.b16 %v603
    %v636 = vunpack.c.l.b16 %v604
    %v637 = vunpack.c.l.b16 %v605
    %v638 = vunpack.c.l.b16 %v606
    %v639 = vunpack.c.l.b16 %v607
    %v640 = vunpack.c.l.b16 %v608
    %v641 = vunpack.c.l.b16 %v609
    %v642 = vunpack.c.l.b16 %v610
    %v643 = vpack.c.b16 %v628, %v627
    %v644 = vpack.c.b16 %v630, %v629
    %v645 = vpack.c.b16 %v632, %v631
    %v646 = vpack.c.b16 %v634, %v633
    %v647 = vpack.c.b16 %v636, %v635
    %v648 = vpack.c.b16 %v638, %v637
    %v649 = vpack.c.b16 %v640, %v639
    %v650 = vpack.c.b16 %v642, %v641
    %659 = vmatpush.bf16.msra.mxu0 %v650
    %660 = vmatpush.bf16.msra.mxu0 %v649
    %661 = vmatpush.bf16.msra.mxu0 %v648
    %662 = vmatpush.bf16.msra.mxu0 %v647
    %663 = vmatpush.bf16.msra.mxu0 %v646
    %664 = vmatpush.bf16.msra.mxu0 %v645
    %665 = vmatpush.bf16.msra.mxu0 %v644
    %666 = vmatpush.bf16.msra.mxu0 %v643
    %667 = vmatmul.bf16.gmra.mxu0 %v592
    %v668 = vpop.f32.mrf.mxu0
    %v669 = vadd.f32 0.0, %v668
    %v670 = vpop.f32.mrf.mxu0
    %v671 = vadd.f32 0.0, %v670
    %672 = vmatmul.bf16.gmra.mxu0 %v593
    %v673 = vpop.f32.mrf.mxu0
    %v674 = vadd.f32 0.0, %v673
    %v675 = vpop.f32.mrf.mxu0
    %v676 = vadd.f32 0.0, %v675
    %677 = vdwg.mxu0
    %v678 = vadd.f32 %v583, %v669
    %v679 = vadd.f32 %v585, %v671
    %v680 = vadd.f32 %v588, %v674
    %v681 = vadd.f32 %v590, %v676
    %v682 = vld [vmem:[%s6] sm:$0x1]
    %v684 = vperm.slane %v682, 0
    %v686 = vadd.f32 %v678, %v684
    %v687 = vadd.f32 %v679, %v684
    %v688 = vadd.f32 %v680, %v684
    %v689 = vadd.f32 %v681, %v684
    %v690 = vadd.f32 %v686, %v687
    %v691 = vadd.f32 %v690, %v688
    %v692 = vadd.f32 %v691, %v689
    %v693 = vrot.slane %v692, 4
    %v694 = vadd.f32 %v692, %v693
    %v695 = vrot.slane %v694, 2
    %v696 = vadd.f32 %v694, %v695
    %v697 = vrot.slane %v696, 1
    %v698 = vadd.f32 %v696, %v697
    %v699 = vmul.f32 %v698, 0.03125
    %v700 = vsub.f32 %v686, %v699
    %v701 = vsub.f32 %v687, %v699
    %v702 = vsub.f32 %v688, %v699
    %v703 = vsub.f32 %v689, %v699
    %v704 = vmul.f32 %v700, %v700
    %v705 = vmul.f32 %v701, %v701
    %v706 = vmul.f32 %v702, %v702
    %v707 = vmul.f32 %v703, %v703
    %v708 = vadd.f32 %v704, %v705
    %v709 = vadd.f32 %v708, %v706
    %v710 = vadd.f32 %v709, %v707
    %v711 = vrot.slane %v710, 4
    %v712 = vadd.f32 %v710, %v711
    %v713 = vrot.slane %v712, 2
    %v714 = vadd.f32 %v712, %v713
    %v715 = vrot.slane %v714, 1
    %v716 = vadd.f32 %v714, %v715
    %v717 = vmul.f32 %v716, 0.03125
    %v718 = vadd.f32 %v717, 1e-05
    %v719 = vrsqrt.pop %v718
    %v720 = vmul.f32 %v719, %v718
    %v721 = vmul.f32 %v720, %v719
    %v722 = vmul.f32 0.5, %v721
    %v723 = vsub.f32 1.5, %v722
    %v724 = vmul.f32 %v719, %v723
    %vm725 = vweird.f32 %v718
    %vm726 = vweird.f32 %v719
    %vm727 = vmor %vm725, %vm726
    %v728 = vsel %vm727, %v719, %v724
    %v729 = vld [vmem:[%s7] sm:$0x1]
    %v730 = vmul.f32 %v728, %v729
    %v731 = vperm.slane %v730, 0
    %v732 = vmul.f32 %v700, %v731
    %v733 = vmul.f32 %v701, %v731
    %v734 = vmul.f32 %v702, %v731
    %v735 = vmul.f32 %v703, %v731
    %v736 = vld [vmem:[%s8] sm:$0x1]
    %v738 = vperm.slane %v736, 0
    %v740 = vadd.f32 %v732, %v738
    %v741 = vadd.f32 %v733, %v738
    %v742 = vadd.f32 %v734, %v738
    %v743 = vadd.f32 %v735, %v738
    %v744 = vmax.f32 %v740, 0.0
    %v745 = vmax.f32 %v741, 0.0
    %v746 = vmax.f32 %v742, 0.0
    %v747 = vmax.f32 %v743, 0.0
    %748 = vst [vmem:[#allocation2] sm:$0xff] %v744
    %749 = vst [vmem:[#allocation2 + $0x8] sm:$0xff] %v745
    %750 = vst [vmem:[#allocation2 + $0x10] sm:$0xff] %v746
    %751 = vst [vmem:[#allocation2 + $0x18] sm:$0xff] %v747
    // Predicated region
    $region38: #{encoder_forward.1} parent=1 // pred_check
      _
    $region39: #{encoder_forward.1} parent=1 // pred_check_branch
      %753 = sbr.rel (0) target = $region41
    $region40: #{encoder_forward.1} parent=1 // pred_region
      %755 = vsyncadd [#allocation3], 0
      %s756 = sshll.u32 [#allocation2], 4
      %s757 = int_to_ptr.vmem [resolvable:$true] %s756
      %s758 = sshll.u32 %s9, 4
      %s759 = int_to_ptr.hbm [resolvable:$true] %s758
      %764 = dma.vmem_to_hbm [thread:$0]  %s757, 512, %s759, [#allocation3], 128, 128, 8
    $region41: #{encoder_forward.1} parent=1 // pred_fallthru
      _
    // Predicated region
    $region42: #{encoder_forward.1} parent=1 // pred_check
      _
    $region43: #{encoder_forward.1} parent=1 // pred_check_branch
      %766 = sbr.rel (0) target = $region45
    $region44: #{encoder_forward.1} parent=1 // pred_region
      %768 = dma.done [#allocation3], 512
    $region45: #{encoder_forward.1} parent=1 // pred_fallthru
      _
    %769 = vsyncpa [#allocation3], 1

</llo_original>
